<compile_context>
chip_gen: v5e
topology: v5e:2x2
jax: 0.10.0
libtpu: 0.0.40
codegen_flags: <defaults>
</compile_context>

<pallas_src>
import math
from typing import NamedTuple, Optional

import jax
import jax.numpy as jnp
from jax.experimental import pallas as pl
from jax.experimental.pallas import tpu as pltpu


class InProjParams(NamedTuple):
    in_features: int
    out_features: int
    bias: bool


# ----------------------------------------------------------------------------
# Tile caps (tuned for the bf16 default compute dtype).
# ----------------------------------------------------------------------------
TM_CAP = 512                       # row tile: halves weight re-reads vs 256
TN_CAP = 512                       # output-column tile (tiled fallback only)
TK_CAP = 512                       # contraction tile (tiled fallback only)
RESIDENT_W_BYTES = 8 * 1024 * 1024  # per-call weight kept fully resident in VMEM


def _round_up(x: int, m: int) -> int:
    return (x + m - 1) // m * m


def _sublane_granule(dtype) -> int:
    # 8 rows / vreg for 32-bit, 16 for 16-bit, 32 for 8-bit types.
    return max(8, 32 // jnp.dtype(dtype).itemsize)


def _pick_row_tile(m: int, cap: int, granule: int) -> int:
    if m <= cap:
        return m if m % 8 == 0 else _round_up(m, granule)
    return cap


def _pick_k_tile(k: int, cap: int) -> int:
    """Contraction tile must divide K exactly (OOB garbage along K would
    contaminate valid output rows). Prefer 128-multiples <= cap."""
    if k <= cap:
        return k
    t = (cap // 128) * 128
    while t >= 128:
        if k % t == 0:
            return t
        t -= 128
    # TODO(synk): K with no 128-aligned divisor falls back to a full-K block; if that
    # ever blows the VMEM budget, zero-pad BOTH x and the weight K dim at call time.
    return k


def _pick_n_tile(n: int, cap: int) -> int:
    # Ragged N is safe (masked edge-block stores), so simply cap it.
    return n if n <= cap else cap


def _vmem_budget_bytes() -> int:
    try:
        info = pltpu.get_tpu_info()
        cap = int(getattr(info, "vmem_capacity_bytes", 64 * 1024 * 1024))
    except Exception:  # pragma: no cover - conservative fallback (v7x physical VMEM)
        cap = 64 * 1024 * 1024
    return (cap * 3) // 4          # leave headroom for Mosaic internal scratch


def _vmem_limit(need_bytes: int) -> int:
    # 2x headroom over the modelled footprint, small floor, capped at 75% of VMEM.
    return int(min(max(2 * need_bytes, 8 * 1024 * 1024), _vmem_budget_bytes()))


# ----------------------------------------------------------------------------
# Kernels.
# ----------------------------------------------------------------------------
def _make_resident_kernel(has_bias: bool):
    """o(tm,N) = x(tm,K) @ w(K,N) [+ b(1,N)]; weight fully VMEM-resident, no K loop."""
    if has_bias:
        def kernel(x_ref, w_ref, b_ref, o_ref):
            acc = jnp.dot(x_ref[...], w_ref[...], preferred_element_type=jnp.float32)
            o_ref[...] = (acc + b_ref[...]).astype(o_ref.dtype)
    else:
        def kernel(x_ref, w_ref, o_ref):
            acc = jnp.dot(x_ref[...], w_ref[...], preferred_element_type=jnp.float32)
            o_ref[...] = acc.astype(o_ref.dtype)
    return kernel


def _make_resident_fused_kernel(has_bias: bool, e: int):
    """Fused qkv: one x(tm,K) @ w(K,3E) matmul, three lane-sliced stores."""
    if has_bias:
        def kernel(x_ref, w_ref, b_ref, q_ref, k_ref, v_ref):
            acc = jnp.dot(x_ref[...], w_ref[...], preferred_element_type=jnp.float32)
            q_ref[...] = (acc[:, 0 * e:1 * e] + b_ref[0]).astype(q_ref.dtype)
            k_ref[...] = (acc[:, 1 * e:2 * e] + b_ref[1]).astype(k_ref.dtype)
            v_ref[...] = (acc[:, 2 * e:3 * e] + b_ref[2]).astype(v_ref.dtype)
    else:
        def kernel(x_ref, w_ref, q_ref, k_ref, v_ref):
            acc = jnp.dot(x_ref[...], w_ref[...], preferred_element_type=jnp.float32)
            q_ref[...] = acc[:, 0 * e:1 * e].astype(q_ref.dtype)
            k_ref[...] = acc[:, 1 * e:2 * e].astype(k_ref.dtype)
            v_ref[...] = acc[:, 2 * e:3 * e].astype(v_ref.dtype)
    return kernel


def _make_tiled_kernel(has_bias: bool):
    """Tiled fallback: grid (M, N, K), f32 VMEM accumulator, K innermost."""
    if has_bias:
        def kernel(x_ref, w_ref, b_ref, o_ref, acc_ref):
            k = pl.program_id(2)

            @pl.when(k == 0)
            def _init():
                acc_ref[...] = jnp.zeros_like(acc_ref)

            acc_ref[...] += jnp.dot(x_ref[...], w_ref[...],
                                    preferred_element_type=jnp.float32)

            @pl.when(k == pl.num_programs(2) - 1)
            def _store():
                o_ref[...] = (acc_ref[...] + b_ref[...]).astype(o_ref.dtype)
    else:
        def kernel(x_ref, w_ref, o_ref, acc_ref):
            k = pl.program_id(2)

            @pl.when(k == 0)
            def _init():
                acc_ref[...] = jnp.zeros_like(acc_ref)

            acc_ref[...] += jnp.dot(x_ref[...], w_ref[...],
                                    preferred_element_type=jnp.float32)

            @pl.when(k == pl.num_programs(2) - 1)
            def _store():
                o_ref[...] = acc_ref[...].astype(o_ref.dtype)
    return kernel


# ----------------------------------------------------------------------------
# Wrappers (glue). Weights arrive pre-transposed / pre-cast from __init__:
#   wt3     : (P, K, N)   per-slot stack, wt3[p] = W_p.T
#   wt_fold : (K, 3E)     folded layout, used only by the fused resident kernel
#   b_stack : (3, 1, E)   float32 (bias kept in f32 for the epilogue add)
# ----------------------------------------------------------------------------
def _proj_single(x2d, wt3, slot, b_stack, bslot, out_dtype, *,
                 resident_w_bytes=RESIDENT_W_BYTES,
                 tm_cap=TM_CAP, tn_cap=TN_CAP, tk_cap=TK_CAP):
    M, K = x2d.shape
    _, kw, N = wt3.shape
    assert kw == K
    xb = jnp.dtype(x2d.dtype).itemsize
    wb = jnp.dtype(wt3.dtype).itemsize
    ob = jnp.dtype(out_dtype).itemsize
    has_bias = b_stack is not None
    tm = _pick_row_tile(M, tm_cap, _sublane_granule(x2d.dtype))
    grid_m = pl.cdiv(M, tm)

    resident_need = (2 * tm * K * xb + 2 * K * N * wb + 2 * tm * N * ob
                     + tm * N * 4 + (2 * N * 4 if has_bias else 0))
    use_resident = (K * N * wb <= resident_w_bytes
                    and resident_need <= _vmem_budget_bytes())

    if use_resident:
        kernel = _make_resident_kernel(has_bias)
        in_specs = [pl.BlockSpec((tm, K), lambda i: (i, 0)),
                    pl.BlockSpec((None, K, N), lambda i: (slot, 0, 0))]
        inputs = [x2d, wt3]
        if has_bias:
            in_specs.append(pl.BlockSpec((None, 1, N), lambda i: (bslot, 0, 0)))
            inputs.append(b_stack)
        return pl.pallas_call(
            kernel,
            out_shape=jax.ShapeDtypeStruct((M, N), out_dtype),
            grid_spec=pltpu.PrefetchScalarGridSpec(
                num_scalar_prefetch=0, grid=(grid_m,),
                in_specs=in_specs,
                out_specs=pl.BlockSpec((tm, N), lambda i: (i, 0))),
            compiler_params=pltpu.CompilerParams(
                dimension_semantics=("parallel",),
                vmem_limit_bytes=_vmem_limit(resident_need)),
        )(*inputs)

    # Tiled fallback for very large K / N.
    tn = _pick_n_tile(N, tn_cap)
    tk = _pick_k_tile(K, tk_cap)
    kernel = _make_tiled_kernel(has_bias)
    in_specs = [pl.BlockSpec((tm, tk), lambda i, j, k: (i, k)),
                pl.BlockSpec((None, tk, tn), lambda i, j, k: (slot, k, j))]
    inputs = [x2d, wt3]
    if has_bias:
        in_specs.append(pl.BlockSpec((None, 1, tn), lambda i, j, k: (bslot, 0, j)))
        inputs.append(b_stack)
    need = (2 * tm * tk * xb + 2 * tk * tn * wb + 2 * tm * tn * ob
            + tm * tn * 4 + (2 * tn * 4 if has_bias else 0))
    return pl.pallas_call(
        kernel,
        out_shape=jax.ShapeDtypeStruct((M, N), out_dtype),
        grid_spec=pltpu.PrefetchScalarGridSpec(
            num_scalar_prefetch=0,
            grid=(grid_m, pl.cdiv(N, tn), K // tk),
            in_specs=in_specs,
            out_specs=pl.BlockSpec((tm, tn), lambda i, j, k: (i, j)),
            scratch_shapes=[pltpu.VMEM((tm, tn), jnp.float32)]),
        compiler_params=pltpu.CompilerParams(
            dimension_semantics=("parallel", "parallel", "arbitrary"),
            vmem_limit_bytes=_vmem_limit(need)),
    )(*inputs)


def _proj_fused_resident(x2d, wt_folded, b_stack, e, out_dtype, *, tm_cap=TM_CAP):
    M, K = x2d.shape
    kw, n3 = wt_folded.shape
    assert kw == K and n3 == 3 * e
    xb = jnp.dtype(x2d.dtype).itemsize
    wb = jnp.dtype(wt_folded.dtype).itemsize
    ob = jnp.dtype(out_dtype).itemsize
    has_bias = b_stack is not None
    tm = _pick_row_tile(M, tm_cap, _sublane_granule(x2d.dtype))
    grid_m = pl.cdiv(M, tm)
    need = (2 * tm * K * xb + 2 * K * n3 * wb + 6 * tm * e * ob
            + tm * n3 * 4 + (2 * n3 * 4 if has_bias else 0))

    kernel = _make_resident_fused_kernel(has_bias, e)
    in_specs = [pl.BlockSpec((tm, K), lambda i: (i, 0)),
                pl.BlockSpec((K, n3), lambda i: (0, 0))]
    inputs = [x2d, wt_folded]
    if has_bias:
        in_specs.append(pl.BlockSpec((3, 1, e), lambda i: (0, 0, 0)))
        inputs.append(b_stack)
    out_sds = jax.ShapeDtypeStruct((M, e), out_dtype)
    out_spec = pl.BlockSpec((tm, e), lambda i: (i, 0))
    return pl.pallas_call(
        kernel,
        out_shape=(out_sds, out_sds, out_sds),
        grid_spec=pltpu.PrefetchScalarGridSpec(
            num_scalar_prefetch=0, grid=(grid_m,),
            in_specs=in_specs,
            out_specs=(out_spec, out_spec, out_spec)),
        compiler_params=pltpu.CompilerParams(
            dimension_semantics=("parallel",),
            vmem_limit_bytes=_vmem_limit(need)),
    )(*inputs)


# ----------------------------------------------------------------------------
# JAX re-implementation of InProjContainer (parameter setup is plain JAX; the
# matmul hot path runs in the Pallas kernels above).
# ----------------------------------------------------------------------------
def _xavier_uniform(rng, shape, dtype=jnp.float32):
    fan_out, fan_in = shape
    bound = math.sqrt(6.0 / (fan_in + fan_out))
    return jax.random.uniform(rng, shape, dtype, minval=-bound, maxval=bound)


class InProjContainer:
    def __init__(self, rng_key, query_proj_params: InProjParams,
                 key_proj_params: Optional[InProjParams],
                 value_proj_params: Optional[InProjParams],
                 param_dtype=jnp.bfloat16,
                 resident_weight_bytes=RESIDENT_W_BYTES,
                 tm_cap=TM_CAP, tn_cap=TN_CAP, tk_cap=TK_CAP):
        assert query_proj_params.in_features == query_proj_params.out_features
        if key_proj_params is None:
            key_proj_params = query_proj_params
        if value_proj_params is None:
            value_proj_params = query_proj_params

        self.same_dimensions = (
            query_proj_params.in_features == key_proj_params.in_features
            and value_proj_params.in_features == key_proj_params.in_features)
        E = self.out_features = query_proj_params.out_features
        self.param_dtype = param_dtype  # bf16 default: MXU fast path, f32 accumulation
        self._caps = dict(resident_w_bytes=resident_weight_bytes,
                          tm_cap=tm_cap, tn_cap=tn_cap, tk_cap=tk_cap)
        wbytes = jnp.dtype(param_dtype).itemsize

        kq, kk, kv = jax.random.split(rng_key, 3)
        if self.same_dimensions:
            w = _xavier_uniform(kq, (3 * E, E))
            self.in_proj_weight = w                      # canonical PyTorch layout (f32)
            self.q_proj_weight = self.k_proj_weight = self.v_proj_weight = None
            # Per-slot, pre-transposed stack: wt_stack[p] == W[p*E:(p+1)*E].T
            self.wt_stack = jnp.transpose(w.reshape(3, E, E), (0, 2, 1)).astype(param_dtype)
            # Folded (E, 3E) layout for the fused (query is key) resident kernel:
            # lane-aligned slices need E % 128 == 0, residency needs it to fit VMEM.
            if E % 128 == 0 and E * 3 * E * wbytes <= resident_weight_bytes:
                self.wt_folded = jnp.transpose(w, (1, 0)).astype(param_dtype)  # (E, 3E)
            else:
                self.wt_folded = None
            self.wtq = self.wtk = self.wtv = None
        else:
            self.in_proj_weight = None
            self.q_proj_weight = _xavier_uniform(kq, (E, query_proj_params.in_features))
            self.k_proj_weight = _xavier_uniform(kk, (E, key_proj_params.in_features))
            self.v_proj_weight = _xavier_uniform(kv, (E, value_proj_params.in_features))
            self.wt_stack = None
            self.wt_folded = None
            self.wtq = self.q_proj_weight.T[None].astype(param_dtype)   # (1, Kq, E)
            self.wtk = self.k_proj_weight.T[None].astype(param_dtype)
            self.wtv = self.v_proj_weight.T[None].astype(param_dtype)

        if query_proj_params.bias:
            self.in_proj_bias = jnp.zeros((3 * E,), jnp.float32)
        else:
            self.in_proj_bias = None

    def _bias_stack(self):
        # Bias is tiny: keep it in f32 for the epilogue add (no bf16 precision loss).
        if self.in_proj_bias is None:
            return None
        return self.in_proj_bias.astype(jnp.float32).reshape(3, 1, self.out_features)

    def _single(self, x2d, wt3, slot, bslot, out_dtype):
        return _proj_single(x2d, wt3, slot, self._bias_stack(), bslot, out_dtype,
                            resident_w_bytes=self._caps["resident_w_bytes"],
                            tm_cap=self._caps["tm_cap"],
                            tn_cap=self._caps["tn_cap"],
                            tk_cap=self._caps["tk_cap"])

    def __call__(self, query, key, value):
        E = self.out_features
        cd = self.param_dtype

        def flatten(x):
            lead = x.shape[:-1]
            x2 = x.reshape(-1, x.shape[-1])
            if x2.dtype != cd:
                x2 = x2.astype(cd)
            return x2, lead

        if self.in_proj_weight is not None:
            if query is key:
                # Fused self-attention fast path: matches PyTorch's id(query)==id(key)
                # branch, which derives q, k AND v from `query` (value is ignored).
                x2d, lead = flatten(query)
                if self.wt_folded is not None:
                    q, k, v = _proj_fused_resident(x2d, self.wt_folded,
                                                   self._bias_stack(), E, query.dtype,
                                                   tm_cap=self._caps["tm_cap"])
                else:
                    q = self._single(x2d, self.wt_stack, 0, 0, query.dtype)
                    k = self._single(x2d, self.wt_stack, 1, 1, query.dtype)
                    v = self._single(x2d, self.wt_stack, 2, 2, query.dtype)
                return tuple(o.reshape(*lead, E) for o in (q, k, v))

            # TODO(synk): the query!=key shared-weight path could batch all three
            # projections into one pallas_call (leading slot grid axis) to amortize
            # launch overhead at tiny M; kept as three resident-weight launches.
            outs = []
            for p, x in enumerate((query, key, value)):
                x2d, lead = flatten(x)
                o = self._single(x2d, self.wt_stack, p, p, x.dtype)
                outs.append(o.reshape(*lead, E))
            return tuple(outs)

        # Distinct input dimensions: three independent projections.
        outs = []
        for p, (x, wt3) in enumerate(zip((query, key, value),
                                         (self.wtq, self.wtk, self.wtv))):
            x2d, lead = flatten(x)
            o = self._single(x2d, wt3, 0, p, x.dtype)
            outs.append(o.reshape(*lead, E))
        return tuple(outs)


# ----------------------------------------------------------------------------
if __name__ == "__main__":
    B, S, E = 2, 16, 128
    root = jax.random.PRNGKey(0)
    k_params, k_q, k_k, k_v, k_b, k_params2, k_params3 = jax.random.split(root, 7)

    query = jax.random.normal(k_q, (B, S, E), jnp.float32)
    key = jax.random.normal(k_k, (B, S, E), jnp.float32)
    value = jax.random.normal(k_v, (B, S, E), jnp.float32)

    params = InProjParams(in_features=E, out_features=E, bias=True)
    BF16_TOL = dict(atol=1e-1, rtol=5e-2)

    # Path 1: default bf16 compute, fused (query is key) resident folded kernel.
    cont = InProjContainer(k_params, params, None, None)
    new_bias = 0.1 * jax.random.normal(k_b, (3 * E,), jnp.float32)
    cont.in_proj_bias = new_bias            # nonzero bias so the bias path is real

    W, b = cont.in_proj_weight, cont.in_proj_bias
    q_ref, k_ref, v_ref = jnp.split(query @ W.T + b, 3, axis=-1)

    q1, k1, v1 = cont(query, query, query)
    jax.block_until_ready((q1, k1, v1))
    assert q1.shape == (B, S, E) and q1.dtype == query.dtype
    assert jnp.allclose(q1, q_ref, **BF16_TOL)
    assert jnp.allclose(k1, k_ref, **BF16_TOL)
    assert jnp.allclose(v1, v_ref, **BF16_TOL)

    # Path 2: distinct q/k/v tensors, shared weight stack (per-slot resident kernels).
    q2, k2, v2 = cont(query, key, value)
    jax.block_until_ready((q2, k2, v2))
    Wq, Wk, Wv = jnp.split(W, 3, axis=0)
    bq, bk, bv = jnp.split(b, 3, axis=0)
    assert jnp.allclose(q2, query @ Wq.T + bq, **BF16_TOL)
    assert jnp.allclose(k2, key @ Wk.T + bk, **BF16_TOL)
    assert jnp.allclose(v2, value @ Wv.T + bv, **BF16_TOL)

    # Path 3: bias disabled -> dedicated no-bias kernels.
    cont_nb = InProjContainer(k_params2, InProjParams(E, E, False), None, None)
    q3, k3, v3 = cont_nb(query, query, query)
    jax.block_until_ready((q3, k3, v3))
    q3r, k3r, v3r = jnp.split(query @ cont_nb.in_proj_weight.T, 3, axis=-1)
    assert jnp.allclose(q3, q3r, **BF16_TOL)
    assert jnp.allclose(k3, k3r, **BF16_TOL)
    assert jnp.allclose(v3, v3r, **BF16_TOL)

    # Path 4: distinct key/value input dims -> per-projection weights.
    kp = InProjParams(in_features=64, out_features=E, bias=True)
    vp = InProjParams(in_features=64, out_features=E, bias=True)
    cont_d = InProjContainer(k_params2, params, kp, vp)
    key64 = jax.random.normal(k_k, (B, S, 64), jnp.float32)
    value64 = jax.random.normal(k_v, (B, S, 64), jnp.float32)
    q4, k4, v4 = cont_d(query, key64, value64)
    jax.block_until_ready((q4, k4, v4))
    assert jnp.allclose(q4, query @ cont_d.q_proj_weight.T + cont_d.in_proj_bias[:E], **BF16_TOL)
    assert jnp.allclose(k4, key64 @ cont_d.k_proj_weight.T + cont_d.in_proj_bias[E:2 * E], **BF16_TOL)
    assert jnp.allclose(v4, value64 @ cont_d.v_proj_weight.T + cont_d.in_proj_bias[2 * E:], **BF16_TOL)

    # Path 5: force the tiled fallback (K accumulation, N tiling, ragged M stores).
    E2 = 256
    params2 = InProjParams(in_features=E2, out_features=E2, bias=True)
    cont_t = InProjContainer(k_params3, params2, None, None,
                             resident_weight_bytes=0,       # disable resident weights
                             tm_cap=16, tn_cap=128, tk_cap=128)
    bias2 = 0.05 * jax.random.normal(k_b, (3 * E2,), jnp.float32)
    cont_t.in_proj_bias = bias2
    query_r = jax.random.normal(k_q, (B, 20, E2), jnp.float32)   # M = 40: ragged vs tm=16
    key_r = jax.random.normal(k_k, (B, 20, E2), jnp.float32)
    value_r = jax.random.normal(k_v, (B, 20, E2), jnp.float32)
    q5, k5, v5 = cont_t(query_r, key_r, value_r)
    jax.block_until_ready((q5, k5, v5))
    Wq2, Wk2, Wv2 = jnp.split(cont_t.in_proj_weight, 3, axis=0)
    assert jnp.allclose(q5, query_r @ Wq2.T + bias2[:E2], **BF16_TOL)
    assert jnp.allclose(k5, key_r @ Wk2.T + bias2[E2:2 * E2], **BF16_TOL)
    assert jnp.allclose(v5, value_r @ Wv2.T + bias2[2 * E2:], **BF16_TOL)

    # Path 6: f32 opt-in (same weights as Path 1, tighter tolerance).
    cont_f32 = InProjContainer(k_params, params, None, None, param_dtype=jnp.float32)
    cont_f32.in_proj_bias = new_bias
    q6, k6, v6 = cont_f32(query, query, query)
    jax.block_until_ready((q6, k6, v6))
    assert jnp.allclose(q6, q_ref, atol=1e-3, rtol=1e-3)
    assert jnp.allclose(k6, k_ref, atol=1e-3, rtol=1e-3)
    assert jnp.allclose(v6, v_ref, atol=1e-3, rtol=1e-3)

    print("KERNEL_OK")
</pallas_src>

<mosaic_0001>
module attributes {stable_mosaic.version = 11 : i64} {
  func.func @kernel(%arg0: i32, %arg1: memref<32x128xbf16, #tpu.memory_space<vmem>>, %arg2: memref<128x384xbf16, #tpu.memory_space<vmem>>, %arg3: memref<3x1x128xf32, #tpu.memory_space<vmem>>, %arg4: memref<32x128xf32, #tpu.memory_space<vmem>>, %arg5: memref<32x128xf32, #tpu.memory_space<vmem>>, %arg6: memref<32x128xf32, #tpu.memory_space<vmem>>) attributes {dimension_semantics = [#tpu.dimension_semantics<parallel>], iteration_bounds = array<i64: 1>, scalar_prefetch = 0 : i64, scratch_operands = 0 : i64, tpu.core_type = #tpu.core_type<tc>, window_params = [{transform_indices = @transform_0, window_bounds = array<i64: 32, 128>}, {pipeline_mode = #tpu.pipeline_mode<synchronous>, transform_indices = @transform_1, window_bounds = array<i64: 128, 384>}, {pipeline_mode = #tpu.pipeline_mode<synchronous>, transform_indices = @transform_2, window_bounds = array<i64: 3, 1, 128>}, {transform_indices = @transform_3, window_bounds = array<i64: 32, 128>}, {transform_indices = @transform_4, window_bounds = array<i64: 32, 128>}, {transform_indices = @transform_5, window_bounds = array<i64: 32, 128>}]} {
    %c0 = arith.constant 0 : index
    %c0_0 = arith.constant 0 : index
    %0 = vector.load %arg1[%c0, %c0_0] : memref<32x128xbf16, #tpu.memory_space<vmem>>, vector<32x128xbf16>
    %c0_1 = arith.constant 0 : index
    %c0_2 = arith.constant 0 : index
    %1 = vector.load %arg2[%c0_1, %c0_2] : memref<128x384xbf16, #tpu.memory_space<vmem>>, vector<128x384xbf16>
    %cst = arith.constant dense<0.000000e+00> : vector<32x384xf32>
    %2 = tpu.matmul %0, %1, %cst {dimension_numbers = #tpu.dot_dimension_numbers<[1], [0], [0], [1], [0, 0, 1, 1], [], []>} : vector<32x128xbf16>, vector<128x384xbf16>, vector<32x384xf32> -> vector<32x384xf32>
    %3 = vector.extract_strided_slice %2 {offsets = [0, 0], sizes = [32, 128], strides = [1, 1]} : vector<32x384xf32> to vector<32x128xf32>
    %c0_3 = arith.constant 0 : index
    %c0_4 = arith.constant 0 : index
    %c0_5 = arith.constant 0 : index
    %4 = vector.load %arg3[%c0_3, %c0_4, %c0_5] : memref<3x1x128xf32, #tpu.memory_space<vmem>>, vector<1x1x128xf32>
    %5 = vector.shape_cast %4 : vector<1x1x128xf32> to vector<1x128xf32>
    %6 = vector.broadcast %5 : vector<1x128xf32> to vector<32x128xf32>
    %7 = arith.addf %3, %6 : vector<32x128xf32>
    %c0_6 = arith.constant 0 : index
    %c0_7 = arith.constant 0 : index
    %8 = vector.load %arg4[%c0_6, %c0_7] : memref<32x128xf32, #tpu.memory_space<vmem>>, vector<32x128xf32>
    tpu.vector_store %arg4[%c0_6, %c0_7], %7 {strides = array<i32>} : memref<32x128xf32, #tpu.memory_space<vmem>>, vector<32x128xf32>,
    %9 = vector.extract_strided_slice %2 {offsets = [0, 128], sizes = [32, 128], strides = [1, 1]} : vector<32x384xf32> to vector<32x128xf32>
    %c1 = arith.constant 1 : index
    %c0_8 = arith.constant 0 : index
    %c0_9 = arith.constant 0 : index
    %10 = vector.load %arg3[%c1, %c0_8, %c0_9] : memref<3x1x128xf32, #tpu.memory_space<vmem>>, vector<1x1x128xf32>
    %11 = vector.shape_cast %10 : vector<1x1x128xf32> to vector<1x128xf32>
    %12 = vector.broadcast %11 : vector<1x128xf32> to vector<32x128xf32>
    %13 = arith.addf %9, %12 : vector<32x128xf32>
    %c0_10 = arith.constant 0 : index
    %c0_11 = arith.constant 0 : index
    %14 = vector.load %arg5[%c0_10, %c0_11] : memref<32x128xf32, #tpu.memory_space<vmem>>, vector<32x128xf32>
    tpu.vector_store %arg5[%c0_10, %c0_11], %13 {strides = array<i32>} : memref<32x128xf32, #tpu.memory_space<vmem>>, vector<32x128xf32>,
    %15 = vector.extract_strided_slice %2 {offsets = [0, 256], sizes = [32, 128], strides = [1, 1]} : vector<32x384xf32> to vector<32x128xf32>
    %c2 = arith.constant 2 : index
    %c0_12 = arith.constant 0 : index
    %c0_13 = arith.constant 0 : index
    %16 = vector.load %arg3[%c2, %c0_12, %c0_13] : memref<3x1x128xf32, #tpu.memory_space<vmem>>, vector<1x1x128xf32>
    %17 = vector.shape_cast %16 : vector<1x1x128xf32> to vector<1x128xf32>
    %18 = vector.broadcast %17 : vector<1x128xf32> to vector<32x128xf32>
    %19 = arith.addf %15, %18 : vector<32x128xf32>
    %c0_14 = arith.constant 0 : index
    %c0_15 = arith.constant 0 : index
    %20 = vector.load %arg6[%c0_14, %c0_15] : memref<32x128xf32, #tpu.memory_space<vmem>>, vector<32x128xf32>
    tpu.vector_store %arg6[%c0_14, %c0_15], %19 {strides = array<i32>} : memref<32x128xf32, #tpu.memory_space<vmem>>, vector<32x128xf32>,
    return
  }
  func.func @transform_0(%arg0: i32) -> (i32, i32) {
    %c0_i32 = arith.constant 0 : i32
    %c0_i32_0 = arith.constant 0 : i32
    return %arg0, %c0_i32 : i32, i32
  }
  func.func @transform_1(%arg0: i32) -> (i32, i32) {
    %c0_i32 = arith.constant 0 : i32
    %c0_i32_0 = arith.constant 0 : i32
    %c0_i32_1 = arith.constant 0 : i32
    return %c0_i32, %c0_i32_0 : i32, i32
  }
  func.func @transform_2(%arg0: i32) -> (i32, i32, i32) {
    %c0_i32 = arith.constant 0 : i32
    %c0_i32_0 = arith.constant 0 : i32
    %c0_i32_1 = arith.constant 0 : i32
    %c0_i32_2 = arith.constant 0 : i32
    return %c0_i32, %c0_i32_0, %c0_i32_1 : i32, i32, i32
  }
  func.func @transform_3(%arg0: i32) -> (i32, i32) {
    %c0_i32 = arith.constant 0 : i32
    %c0_i32_0 = arith.constant 0 : i32
    return %arg0, %c0_i32 : i32, i32
  }
  func.func @transform_4(%arg0: i32) -> (i32, i32) {
    %c0_i32 = arith.constant 0 : i32
    %c0_i32_0 = arith.constant 0 : i32
    return %arg0, %c0_i32 : i32, i32
  }
  func.func @transform_5(%arg0: i32) -> (i32, i32) {
    %c0_i32 = arith.constant 0 : i32
    %c0_i32_0 = arith.constant 0 : i32
    return %arg0, %c0_i32 : i32, i32
  }
}

</mosaic_0001>

<llo_original>
// kernel: tpu_custom_call.1
$region0: #{tpu_custom_call.1}
  #allocation0 [shape = 'u32[]', space=smem, size = 0x4, offset = 0x4, fixed_abs, tag = 'smem constant byte address 0x4 - core index']
  #allocation1 [shape = 'u32[72,128]{1,0:T(1,128)}', space=vmem, size = 0x9000, scoped, tag = 'internal scratch']
  %s0 = inlined_call_operand.hbm [shape: bf16[32,128], index: 0, kind: input, shape index: {}]
  %s1 = inlined_call_operand.hbm [shape: bf16[128,384], index: 1, kind: input, shape index: {}]
  %s2 = inlined_call_operand.hbm [shape: f32[3,1,128], index: 2, kind: input, shape index: {}]
  %s3 = inlined_call_operand.hbm [shape: f32[32,128], index: 3, kind: output, shape index: {0}]
  %s4 = inlined_call_operand.hbm [shape: f32[32,128], index: 4, kind: output, shape index: {1}]
  %s5 = inlined_call_operand.hbm [shape: f32[32,128], index: 5, kind: output, shape index: {2}]
  %6 = xla_tuple %s3, %s4, %s5
  %s7 = sld [smem:[#allocation0]]
  $region50: #{tpu_custom_call.1} parent=0
    _
  %s9 = ssub.s32 1, %s7
  %s10 = scalar_select 0, %s9, %s7
  $region1: #{tpu_custom_call.1} parent=0
    #allocation2 [shape = 'u8[8192]{0}', space=vmem, size = 0x2000, scoped, tag = 'input window, operand 0, single buffered']
    #allocation3 [shape = 's32[1]{0}', space=sflag, size = 0x4, scoped, tag = 'scoped memory for tpu_custom_call.1']
    #allocation4 [shape = 's32[1]{0}', space=sflag, size = 0x4, scoped, tag = 'scoped memory for tpu_custom_call.1']
    #allocation5 [shape = 'u8[98304]{0}', space=vmem, size = 0x18000, scoped, tag = 'input window, operand 1, single buffered']
    #allocation6 [shape = 's32[1]{0}', space=sflag, size = 0x4, scoped, tag = 'scoped memory for tpu_custom_call.1']
    #allocation7 [shape = 'u8[1536]{0}', space=vmem, size = 0x800, scoped, tag = 'input window, operand 2, single buffered']
    #allocation8 [shape = 'u8[16384]{0}', space=vmem, size = 0x4000, scoped, tag = 'output window, operand 0, single buffered']
    #allocation9 [shape = 'u8[16384]{0}', space=vmem, size = 0x4000, scoped, tag = 'output window, operand 1, single buffered']
    #allocation10 [shape = 's32[1]{0}', space=sflag, size = 0x4, scoped, tag = 'scoped memory for tpu_custom_call.1']
    #allocation11 [shape = 'u8[16384]{0}', space=vmem, size = 0x4000, scoped, tag = 'output window, operand 2, single buffered']
    %11 = vsyncpa [#allocation3], 0
    %12 = vsyncpa [#allocation6], 0
    %13 = vsyncpa [#allocation4], 0
    %14 = vsyncpa [#allocation10], 0
    // Predicated region
    $region2: #{tpu_custom_call.1} parent=1 // pred_check
      _
    $region3: #{tpu_custom_call.1} parent=1 // pred_check_branch
      %16 = sbr.rel (0) target = $region5
    $region4: #{tpu_custom_call.1} parent=1 // pred_region
      %18 = vsyncadd [#allocation3], 0
      %s19 = sshll.u32 %s0, 4
      %s20 = int_to_ptr.hbm [resolvable:$true] %s19
      %s21 = sshll.u32 [#allocation2], 4
      %s22 = int_to_ptr.vmem [resolvable:$true] %s21
      %27 = dma.hbm_to_vmem [thread:$0]  %s20, 256, %s22, [#allocation3], 64, 64, 4
    $region5: #{tpu_custom_call.1} parent=1 // pred_fallthru
      _
    // Predicated region
    $region6: #{tpu_custom_call.1} parent=1 // pred_check
      _
    $region7: #{tpu_custom_call.1} parent=1 // pred_check_branch
      %29 = sbr.rel (0) target = $region9
    $region8: #{tpu_custom_call.1} parent=1 // pred_region
      %31 = vsyncadd [#allocation6], 0
      %s32 = sshll.u32 %s1, 4
      %s33 = int_to_ptr.hbm [resolvable:$true] %s32
      %s34 = sshll.u32 [#allocation5], 4
      %s35 = int_to_ptr.vmem [resolvable:$true] %s34
      %40 = dma.hbm_to_vmem [thread:$0]  %s33, 3072, %s35, [#allocation6], 192, 192, 12
    $region9: #{tpu_custom_call.1} parent=1 // pred_fallthru
      _
    // Predicated region
    $region10: #{tpu_custom_call.1} parent=1 // pred_check
      _
    $region11: #{tpu_custom_call.1} parent=1 // pred_check_branch
      %42 = sbr.rel (0) target = $region13
    $region12: #{tpu_custom_call.1} parent=1 // pred_region
      %44 = vsyncadd [#allocation6], 0
      %s45 = sshll.u32 %s2, 4
      %s46 = int_to_ptr.hbm [resolvable:$true] %s45
      %s47 = sshll.u32 [#allocation7], 4
      %s48 = int_to_ptr.vmem [resolvable:$true] %s47
      %53 = dma.hbm_to_vmem [thread:$0]  %s46, 48, %s48, [#allocation6], 16, 16, 1
    $region13: #{tpu_custom_call.1} parent=1 // pred_fallthru
      _
    // Predicated region
    $region14: #{tpu_custom_call.1} parent=1 // pred_check
      _
    $region15: #{tpu_custom_call.1} parent=1 // pred_check_branch
      %55 = sbr.rel (0) target = $region17
    $region16: #{tpu_custom_call.1} parent=1 // pred_region
      %57 = dma.done [#allocation3], 256
    $region17: #{tpu_custom_call.1} parent=1 // pred_fallthru
      _
    // Predicated region
    $region18: #{tpu_custom_call.1} parent=1 // pred_check
      _
    $region19: #{tpu_custom_call.1} parent=1 // pred_check_branch
      %59 = sbr.rel (0) target = $region21
    $region20: #{tpu_custom_call.1} parent=1 // pred_region
      %61 = dma.done [#allocation6], 3072
    $region21: #{tpu_custom_call.1} parent=1 // pred_fallthru
      _
    // Predicated region
    $region22: #{tpu_custom_call.1} parent=1 // pred_check
      _
    $region23: #{tpu_custom_call.1} parent=1 // pred_check_branch
      %63 = sbr.rel (0) target = $region25
    $region24: #{tpu_custom_call.1} parent=1 // pred_region
      %65 = dma.done [#allocation6], 48
    $region25: #{tpu_custom_call.1} parent=1 // pred_fallthru
      _
    %v66 = vld [vmem:[#allocation2] sm:$0xf]
    %v67 = vld [vmem:[#allocation2 + $0x4] sm:$0xf]
    %v68 = vld [vmem:[#allocation2 + $0x8] sm:$0xf]
    %v69 = vld [vmem:[#allocation2 + $0xc] sm:$0xf]
    %v70 = vld [vmem:[#allocation5] sm:$0xff]
    %v71 = vld [vmem:[#allocation5 + $0x8] sm:$0xf]
    %v72 = vld [vmem:[#allocation5 + $0xc] sm:$0xff]
    %v73 = vld [vmem:[#allocation5 + $0x14] sm:$0xf]
    %v74 = vld [vmem:[#allocation5 + $0x18] sm:$0xff]
    %v75 = vld [vmem:[#allocation5 + $0x20] sm:$0xf]
    %v76 = vld [vmem:[#allocation5 + $0x24] sm:$0xff]
    %v77 = vld [vmem:[#allocation5 + $0x2c] sm:$0xf]
    %v78 = vld [vmem:[#allocation5 + $0x30] sm:$0xff]
    %v79 = vld [vmem:[#allocation5 + $0x38] sm:$0xf]
    %v80 = vld [vmem:[#allocation5 + $0x3c] sm:$0xff]
    %v81 = vld [vmem:[#allocation5 + $0x44] sm:$0xf]
    %v82 = vld [vmem:[#allocation5 + $0x48] sm:$0xff]
    %v83 = vld [vmem:[#allocation5 + $0x50] sm:$0xf]
    %v84 = vld [vmem:[#allocation5 + $0x54] sm:$0xff]
    %v85 = vld [vmem:[#allocation5 + $0x5c] sm:$0xf]
    %v86 = vld [vmem:[#allocation5 + $0x60] sm:$0xff]
    %v87 = vld [vmem:[#allocation5 + $0x68] sm:$0xf]
    %v88 = vld [vmem:[#allocation5 + $0x6c] sm:$0xff]
    %v89 = vld [vmem:[#allocation5 + $0x74] sm:$0xf]
    %v90 = vld [vmem:[#allocation5 + $0x78] sm:$0xff]
    %v91 = vld [vmem:[#allocation5 + $0x80] sm:$0xf]
    %v92 = vld [vmem:[#allocation5 + $0x84] sm:$0xff]
    %v93 = vld [vmem:[#allocation5 + $0x8c] sm:$0xf]
    %v94 = vld [vmem:[#allocation5 + $0x90] sm:$0xff]
    %v95 = vld [vmem:[#allocation5 + $0x98] sm:$0xf]
    %v96 = vld [vmem:[#allocation5 + $0x9c] sm:$0xff]
    %v97 = vld [vmem:[#allocation5 + $0xa4] sm:$0xf]
    %v98 = vld [vmem:[#allocation5 + $0xa8] sm:$0xff]
    %v99 = vld [vmem:[#allocation5 + $0xb0] sm:$0xf]
    %v100 = vld [vmem:[#allocation5 + $0xb4] sm:$0xff]
    %v101 = vld [vmem:[#allocation5 + $0xbc] sm:$0xf]
    %v106 = vunpack.c.l.b16 %v66
    %v107 = vunpack.c.l.b16 %v67
    %v108 = vunpack.c.l.b16 %v68
    %v109 = vunpack.c.l.b16 %v69
    %v110 = vpack.c.b16 %v107, %v106
    %v111 = vpack.c.b16 %v109, %v108
    %v146 = vunpack.c.l.b16 %v70
    %v147 = vunpack.c.h.b16 %v70
    %v148 = vunpack.c.l.b16 %v71
    %v149 = vunpack.c.l.b16 %v72
    %v150 = vunpack.c.h.b16 %v72
    %v151 = vunpack.c.l.b16 %v73
    %v152 = vunpack.c.l.b16 %v74
    %v153 = vunpack.c.h.b16 %v74
    %v154 = vunpack.c.l.b16 %v75
    %v155 = vunpack.c.l.b16 %v76
    %v156 = vunpack.c.h.b16 %v76
    %v157 = vunpack.c.l.b16 %v77
    %v158 = vunpack.c.l.b16 %v78
    %v159 = vunpack.c.h.b16 %v78
    %v160 = vunpack.c.l.b16 %v79
    %v161 = vunpack.c.l.b16 %v80
    %v162 = vunpack.c.h.b16 %v80
    %v163 = vunpack.c.l.b16 %v81
    %v164 = vunpack.c.l.b16 %v82
    %v165 = vunpack.c.h.b16 %v82
    %v166 = vunpack.c.l.b16 %v83
    %v167 = vunpack.c.l.b16 %v84
    %v168 = vunpack.c.h.b16 %v84
    %v169 = vunpack.c.l.b16 %v85
    %v170 = vunpack.c.l.b16 %v86
    %v171 = vunpack.c.h.b16 %v86
    %v172 = vunpack.c.l.b16 %v87
    %v173 = vunpack.c.l.b16 %v88
    %v174 = vunpack.c.h.b16 %v88
    %v175 = vunpack.c.l.b16 %v89
    %v176 = vunpack.c.l.b16 %v90
    %v177 = vunpack.c.h.b16 %v90
    %v178 = vunpack.c.l.b16 %v91
    %v179 = vunpack.c.l.b16 %v92
    %v180 = vunpack.c.h.b16 %v92
    %v181 = vunpack.c.l.b16 %v93
    %v182 = vunpack.c.l.b16 %v94
    %v183 = vunpack.c.h.b16 %v94
    %v184 = vunpack.c.l.b16 %v95
    %v185 = vunpack.c.l.b16 %v96
    %v186 = vunpack.c.h.b16 %v96
    %v187 = vunpack.c.l.b16 %v97
    %v188 = vunpack.c.l.b16 %v98
    %v189 = vunpack.c.h.b16 %v98
    %v190 = vunpack.c.l.b16 %v99
    %v191 = vunpack.c.l.b16 %v100
    %v192 = vunpack.c.h.b16 %v100
    %v193 = vunpack.c.l.b16 %v101
    %v194 = vpack.c.b16 %v149, %v146
    %v195 = vpack.c.b16 %v150, %v147
    %v196 = vpack.c.b16 %v151, %v148
    %v197 = vpack.c.b16 %v155, %v152
    %v198 = vpack.c.b16 %v156, %v153
    %v199 = vpack.c.b16 %v157, %v154
    %v200 = vpack.c.b16 %v161, %v158
    %v201 = vpack.c.b16 %v162, %v159
    %v202 = vpack.c.b16 %v163, %v160
    %v203 = vpack.c.b16 %v167, %v164
    %v204 = vpack.c.b16 %v168, %v165
    %v205 = vpack.c.b16 %v169, %v166
    %v206 = vpack.c.b16 %v173, %v170
    %v207 = vpack.c.b16 %v174, %v171
    %v208 = vpack.c.b16 %v175, %v172
    %v209 = vpack.c.b16 %v179, %v176
    %v210 = vpack.c.b16 %v180, %v177
    %v211 = vpack.c.b16 %v181, %v178
    %v212 = vpack.c.b16 %v185, %v182
    %v213 = vpack.c.b16 %v186, %v183
    %v214 = vpack.c.b16 %v187, %v184
    %v215 = vpack.c.b16 %v191, %v188
    %v216 = vpack.c.b16 %v192, %v189
    %v217 = vpack.c.b16 %v193, %v190
    %242 = vmatpush.bf16.msra.mxu0 %v215
    %243 = vmatpush.bf16.msra.mxu0 %v212
    %244 = vmatpush.bf16.msra.mxu0 %v209
    %245 = vmatpush.bf16.msra.mxu0 %v206
    %246 = vmatpush.bf16.msra.mxu0 %v203
    %247 = vmatpush.bf16.msra.mxu0 %v200
    %248 = vmatpush.bf16.msra.mxu0 %v197
    %249 = vmatpush.bf16.msra.mxu0 %v194
    %250 = vmatmul.bf16.gmra.mxu0 %v110
    %v251 = vpop.f32.mrf.mxu0
    %v252 = vadd.f32 0.0, %v251
    %v253 = vpop.f32.mrf.mxu0
    %v254 = vadd.f32 0.0, %v253
    %255 = vmatmul.bf16.gmra.mxu0 %v111
    %v256 = vpop.f32.mrf.mxu0
    %v257 = vadd.f32 0.0, %v256
    %v258 = vpop.f32.mrf.mxu0
    %v259 = vadd.f32 0.0, %v258
    %260 = vdwg.mxu0
    %261 = vmatpush.bf16.msra.mxu0 %v216
    %262 = vmatpush.bf16.msra.mxu0 %v213
    %263 = vmatpush.bf16.msra.mxu0 %v210
    %264 = vmatpush.bf16.msra.mxu0 %v207
    %265 = vmatpush.bf16.msra.mxu0 %v204
    %266 = vmatpush.bf16.msra.mxu0 %v201
    %267 = vmatpush.bf16.msra.mxu0 %v198
    %268 = vmatpush.bf16.msra.mxu0 %v195
    %269 = vmatmul.bf16.gmra.mxu0 %v110
    %v270 = vpop.f32.mrf.mxu0
    %v271 = vadd.f32 0.0, %v270
    %v272 = vpop.f32.mrf.mxu0
    %v273 = vadd.f32 0.0, %v272
    %274 = vmatmul.bf16.gmra.mxu0 %v111
    %v275 = vpop.f32.mrf.mxu0
    %v276 = vadd.f32 0.0, %v275
    %v277 = vpop.f32.mrf.mxu0
    %v278 = vadd.f32 0.0, %v277
    %279 = vdwg.mxu0
    %280 = vmatpush.bf16.msra.mxu0 %v217
    %281 = vmatpush.bf16.msra.mxu0 %v214
    %282 = vmatpush.bf16.msra.mxu0 %v211
    %283 = vmatpush.bf16.msra.mxu0 %v208
    %284 = vmatpush.bf16.msra.mxu0 %v205
    %285 = vmatpush.bf16.msra.mxu0 %v202
    %286 = vmatpush.bf16.msra.mxu0 %v199
    %287 = vmatpush.bf16.msra.mxu0 %v196
    %288 = vmatmul.bf16.gmra.mxu0 %v110
    %v289 = vpop.f32.mrf.mxu0
    %v290 = vadd.f32 0.0, %v289
    %v291 = vpop.f32.mrf.mxu0
    %v292 = vadd.f32 0.0, %v291
    %293 = vmatmul.bf16.gmra.mxu0 %v111
    %v294 = vpop.f32.mrf.mxu0
    %v295 = vadd.f32 0.0, %v294
    %v296 = vpop.f32.mrf.mxu0
    %v297 = vadd.f32 0.0, %v296
    %298 = vdwg.mxu0
    %v299 = vld [vmem:[#allocation7] sm:$0x1]
    %v301 = vperm.slane %v299, 0
    %v303 = vadd.f32 %v252, %v301
    %v304 = vadd.f32 %v254, %v301
    %v305 = vadd.f32 %v257, %v301
    %v306 = vadd.f32 %v259, %v301
    %307 = vst [vmem:[#allocation8] sm:$0xff] %v303
    %308 = vst [vmem:[#allocation8 + $0x8] sm:$0xff] %v304
    %309 = vst [vmem:[#allocation8 + $0x10] sm:$0xff] %v305
    %310 = vst [vmem:[#allocation8 + $0x18] sm:$0xff] %v306
    %s311 = scalar_lea.vmem [#allocation7], 1
    %v312 = vld [vmem:[%s311] sm:$0x1]
    %v314 = vperm.slane %v312, 0
    %v316 = vadd.f32 %v271, %v314
    %v317 = vadd.f32 %v273, %v314
    %v318 = vadd.f32 %v276, %v314
    %v319 = vadd.f32 %v278, %v314
    %320 = vst [vmem:[#allocation9] sm:$0xff] %v316
    %321 = vst [vmem:[#allocation9 + $0x8] sm:$0xff] %v317
    %322 = vst [vmem:[#allocation9 + $0x10] sm:$0xff] %v318
    %323 = vst [vmem:[#allocation9 + $0x18] sm:$0xff] %v319
    %s324 = scalar_lea.vmem [#allocation7], 2
    %v325 = vld [vmem:[%s324] sm:$0x1]
    %v327 = vperm.slane %v325, 0
    %v329 = vadd.f32 %v290, %v327
    %v330 = vadd.f32 %v292, %v327
    %v331 = vadd.f32 %v295, %v327
    %v332 = vadd.f32 %v297, %v327
    %333 = vst [vmem:[#allocation11] sm:$0xff] %v329
    %334 = vst [vmem:[#allocation11 + $0x8] sm:$0xff] %v330
    %335 = vst [vmem:[#allocation11 + $0x10] sm:$0xff] %v331
    %336 = vst [vmem:[#allocation11 + $0x18] sm:$0xff] %v332
    // Predicated region
    $region26: #{tpu_custom_call.1} parent=1 // pred_check
      _
    $region27: #{tpu_custom_call.1} parent=1 // pred_check_branch
      %338 = sbr.rel (0) target = $region29
    $region28: #{tpu_custom_call.1} parent=1 // pred_region
      %340 = vsyncadd [#allocation4], 0
      %s341 = sshll.u32 [#allocation8], 4
      %s342 = int_to_ptr.vmem [resolvable:$true] %s341
      %s343 = sshll.u32 %s3, 4
      %s344 = int_to_ptr.hbm [resolvable:$true] %s343
      %349 = dma.vmem_to_hbm [thread:$0]  %s342, 512, %s344, [#allocation4], 128, 128, 8
    $region29: #{tpu_custom_call.1} parent=1 // pred_fallthru
      _
    // Predicated region
    $region30: #{tpu_custom_call.1} parent=1 // pred_check
      _
    $region31: #{tpu_custom_call.1} parent=1 // pred_check_branch
      %351 = sbr.rel (0) target = $region33
    $region32: #{tpu_custom_call.1} parent=1 // pred_region
      %353 = vsyncadd [#allocation10], 0
      %s354 = sshll.u32 [#allocation9], 4
      %s355 = int_to_ptr.vmem [resolvable:$true] %s354
      %s356 = sshll.u32 %s4, 4
      %s357 = int_to_ptr.hbm [resolvable:$true] %s356
      %362 = dma.vmem_to_hbm [thread:$0]  %s355, 512, %s357, [#allocation10], 128, 128, 8
    $region33: #{tpu_custom_call.1} parent=1 // pred_fallthru
      _
    // Predicated region
    $region34: #{tpu_custom_call.1} parent=1 // pred_check
      _
    $region35: #{tpu_custom_call.1} parent=1 // pred_check_branch
      %364 = sbr.rel (0) target = $region37
    $region36: #{tpu_custom_call.1} parent=1 // pred_region
      %366 = vsyncadd [#allocation10], 0
      %s367 = sshll.u32 [#allocation11], 4
      %s368 = int_to_ptr.vmem [resolvable:$true] %s367
      %s369 = sshll.u32 %s5, 4
      %s370 = int_to_ptr.hbm [resolvable:$true] %s369
      %375 = dma.vmem_to_hbm [thread:$0]  %s368, 512, %s370, [#allocation10], 128, 128, 8
    $region37: #{tpu_custom_call.1} parent=1 // pred_fallthru
      _
    // Predicated region
    $region38: #{tpu_custom_call.1} parent=1 // pred_check
      _
    $region39: #{tpu_custom_call.1} parent=1 // pred_check_branch
      %377 = sbr.rel (0) target = $region41
    $region40: #{tpu_custom_call.1} parent=1 // pred_region
      %379 = dma.done [#allocation4], 512
    $region41: #{tpu_custom_call.1} parent=1 // pred_fallthru
      _
    // Predicated region
    $region42: #{tpu_custom_call.1} parent=1 // pred_check
      _
    $region43: #{tpu_custom_call.1} parent=1 // pred_check_branch
      %381 = sbr.rel (0) target = $region45
    $region44: #{tpu_custom_call.1} parent=1 // pred_region
      %383 = dma.done [#allocation10], 512
    $region45: #{tpu_custom_call.1} parent=1 // pred_fallthru
      _
    // Predicated region
    $region46: #{tpu_custom_call.1} parent=1 // pred_check
      _
    $region47: #{tpu_custom_call.1} parent=1 // pred_check_branch
      %385 = sbr.rel (0) target = $region49
    $region48: #{tpu_custom_call.1} parent=1 // pred_region
      %387 = dma.done [#allocation10], 512
    $region49: #{tpu_custom_call.1} parent=1 // pred_fallthru
      _
    %388 = vsyncpa [#allocation3], 1
    %389 = vsyncpa [#allocation6], 1
    %390 = vsyncpa [#allocation4], 1
    %391 = vsyncpa [#allocation10], 1

</llo_original>
